<compile_context>
chip_gen: v7x
topology: tpu7x:2x2x1
jax: 0.10.0
libtpu: 0.0.40
codegen_flags: <defaults>
</compile_context>

<pallas_src>
import jax
import jax.numpy as jnp
from jax.experimental import pallas as pl
from jax.experimental.pallas import tpu as pltpu

NEG_SLOPE = 0.01  # torch.nn.LeakyReLU / F.leaky_relu default


def _leaky_relu(x):
    return jnp.where(x >= 0, x, NEG_SLOPE * x)


def _choose_tb(B, D, target_rows=512, max_tb=32):
    """Batches per grid step TB such that:
       * TB divides B (no remainder blocks),
       * TM = TB*D is a multiple of 8 sublanes, or TB == B (block == full slab),
       * TM ~ target_rows for MXU M-dim fill, with the spatial unroll bounded,
       * >= 2 grid steps kept when possible (v7x has 2 TensorCores)."""
    cands = [tb for tb in range(1, B + 1)
             if B % tb == 0 and tb <= max_tb and ((tb * D) % 8 == 0 or tb == B)]
    if not cands:
        cands = [B]
    good = [tb for tb in cands if tb * D <= target_rows]
    multi = [tb for tb in good if tb < B]          # keeps >= 2 grid steps
    if multi:
        return max(multi)
    if good:
        return max(good)
    return min(cands)


def _make_net_kernel(TB, D, L):
    """Kernel factory; TB/D/L are static Python ints baked into the body."""

    def net_kernel(x_ref, m_ref,
                   w_ref, wabs_ref, s_irm_ref, b_irm_ref,
                   ws_ref, bs_ref,
                   wtT_ref, bt_ref,
                   woT_ref, bo_ref,
                   out_ref):
        """Row-slab kernel: rows = TB batch elements x D channels, columns = L.

        x_ref, m_ref   : (TM, L) f32   rows of x.transpose(1,2) flattened over (batch, dim)
        w_ref          : (L, L)  bf16  IRM weight
        wabs_ref       : (L, L)  bf16  |IRM weight|
        s_irm_ref      : (1, L)  f32   IRM scale
        b_irm_ref      : (1, L)  f32   IRM bias
        ws_ref, bs_ref : (D, D) bf16, (D, 1) f32   spatial Linear
        wtT_ref, bt_ref: (L, L) bf16, (1, L) f32   temporal Linear (weight pre-transposed)
        woT_ref, bo_ref: (L, L) bf16, (1, L) f32   output Linear (weight pre-transposed)
        out_ref        : (TM, L) f32
        """
        f32 = jnp.float32
        bf16 = jnp.bfloat16

        x = x_ref[...].astype(f32)                               # (TM, L)
        mk = jnp.where(m_ref[...] != 0, 1.0, 0.0).astype(f32)    # exact `m == 0` semantics

        # --- IRM: weight rows zeroed where mask==0, column-normalized by sum|w| ---
        # numer[r, o] = sum_i mk[r, i] * x[r, i] * w[i, o]
        # denom[r, o] = sum_i mk[r, i] * |w[i, o]| + 1e-5
        numer = jnp.dot((mk * x).astype(bf16), w_ref[...],
                        preferred_element_type=f32)
        denom = jnp.dot(mk.astype(bf16), wabs_ref[...],
                        preferred_element_type=f32) + 1e-5
        inv = pl.reciprocal(denom, approx=True)                  # EUP slot, ~free
        irm = s_irm_ref[...] * (numer * inv) + b_irm_ref[...]    # (TM, L) f32
        h = _leaky_relu(irm)                                     # leaky_relu after input layer

        # --- spatial layers: Linear(dim, dim) + LeakyReLU, residual ---
        # In row-slab layout this is a per-batch left-multiply by Ws (out_dim, in_dim).
        # Results are staged directly into out_ref to avoid any concatenation.
        ws_w = ws_ref[...]                                       # (D, D) bf16, hoisted
        bs_full = jnp.broadcast_to(bs_ref[...], (D, L))          # hoisted broadcast (f32)
        for b in range(TB):                                      # static unroll, TB small
            hb = h[b * D:(b + 1) * D, :]                         # (D, L) f32
            sb = jnp.dot(ws_w, hb.astype(bf16), preferred_element_type=f32)
            out_ref[b * D:(b + 1) * D, :] = _leaky_relu(sb + bs_full) + hb

        s = out_ref[...]                                         # (TM, L) staged spatial result

        # --- temporal layers: Linear(length, length) + LeakyReLU, residual ---
        t = _leaky_relu(jnp.dot(s.astype(bf16), wtT_ref[...],
                                preferred_element_type=f32) + bt_ref[...]) + s

        # --- output layer: Linear(length, length) ---
        out_ref[...] = jnp.dot(t.astype(bf16), woT_ref[...],
                               preferred_element_type=f32) + bo_ref[...]

    return net_kernel


def net_forward(x, m, params):
    """x, m: (B, L, D) float32. Returns (B, L, D) float32."""
    B, L, D = x.shape
    w_irm, s_irm, b_irm, ws, bs, wt, bt, wo, bo = params

    f32, bf16 = jnp.float32, jnp.bfloat16

    # Flatten (batch, dim) into rows of a lane-dense (R, L) slab.
    # (Transpose is one XLA pass; the reshape is metadata only.)
    xf = jnp.transpose(x, (0, 2, 1)).reshape(B * D, L).astype(f32)
    mf = jnp.transpose(m, (0, 2, 1)).reshape(B * D, L).astype(f32)

    # Weight preprocessing, done once outside the kernel: pre-transpose, pre-abs, bf16.
    w_bf = w_irm.astype(bf16)
    wabs_bf = jnp.abs(w_irm).astype(bf16)
    ws_bf = ws.astype(bf16)
    wtT_bf = wt.T.astype(bf16)
    woT_bf = wo.T.astype(bf16)
    s_irm_r = s_irm.reshape(1, L).astype(f32)
    b_irm_r = b_irm.reshape(1, L).astype(f32)
    bs_col = bs.reshape(D, 1).astype(f32)
    bt_row = bt.reshape(1, L).astype(f32)
    bo_row = bo.reshape(1, L).astype(f32)

    TB = _choose_tb(B, D)
    TM = TB * D
    R = B * D
    grid = (R // TM,)                 # TB divides B, so TM divides R exactly

    row_spec = pl.BlockSpec((TM, L), lambda i: (i, 0))
    fixed = lambda shape: pl.BlockSpec(shape, lambda i: (0, 0))

    # VMEM budget: double-buffered row slabs + resident bf16 weights + headroom.
    # Clamp to [32 MiB, 48 MiB] — safe on v5e/v6e (128 MiB) and v7x (64 MiB) alike.
    blk_bytes = TM * L * 4
    w_bytes = (3 * L * L + D * D) * 2 + (4 * L + D) * 4
    need = 2 * 3 * blk_bytes + 2 * w_bytes + (2 << 20)
    vmem_limit = int(min(max(need, 32 * 1024 * 1024), 48 * 1024 * 1024))

    out_f = pl.pallas_call(
        _make_net_kernel(TB, D, L),
        out_shape=jax.ShapeDtypeStruct((R, L), f32),
        grid=grid,
        in_specs=[
            row_spec,            # x rows
            row_spec,            # m rows
            fixed((L, L)),       # IRM weight (bf16)
            fixed((L, L)),       # |IRM weight| (bf16)
            fixed((1, L)),       # IRM scale
            fixed((1, L)),       # IRM bias
            fixed((D, D)),       # spatial weight (bf16)
            fixed((D, 1)),       # spatial bias (column)
            fixed((L, L)),       # temporal weight^T (bf16)
            fixed((1, L)),       # temporal bias
            fixed((L, L)),       # output weight^T (bf16)
            fixed((1, L)),       # output bias
        ],
        out_specs=row_spec,
        compiler_params=pltpu.CompilerParams(
            dimension_semantics=("parallel",),
            vmem_limit_bytes=vmem_limit,
        ),
    )(xf, mf, w_bf, wabs_bf, s_irm_r, b_irm_r,
      ws_bf, bs_col, wtT_bf, bt_row, woT_bf, bo_row)

    return jnp.transpose(out_f.reshape(B, D, L), (0, 2, 1))      # (B, L, D)


def init_params(key, dim, length):
    """Deterministic params matching the PyTorch module's shapes/inits."""
    def linear_init(k, out_f, in_f):
        kw, kb = jax.random.split(k)
        bound = 1.0 / jnp.sqrt(jnp.float32(in_f))
        w = jax.random.uniform(kw, (out_f, in_f), jnp.float32, -bound, bound)
        b = jax.random.uniform(kb, (out_f,), jnp.float32, -bound, bound)
        return w, b

    k1, k2, k3 = jax.random.split(key, 3)
    # IRM(length, length): weight=ones, bias=zeros, scale=ones (per __init__)
    w_irm = jnp.ones((length, length), jnp.float32)
    b_irm = jnp.zeros((length,), jnp.float32)
    s_irm = jnp.ones((length,), jnp.float32)
    ws, bs = linear_init(k1, dim, dim)          # spatial Linear(dim, dim)
    wt, bt = linear_init(k2, length, length)    # temporal Linear(length, length)
    wo, bo = linear_init(k3, length, length)    # output Linear(length, length)
    return (w_irm, s_irm, b_irm, ws, bs, wt, bt, wo, bo)


def net_reference(x, m, params):
    """Pure-JAX f32 reference matching the PyTorch forward exactly."""
    (w_irm, s_irm, b_irm, ws, bs, wt, bt, wo, bo) = params
    xT = jnp.transpose(x, (0, 2, 1))            # (B, D, L)
    mk = (jnp.transpose(m, (0, 2, 1)) != 0).astype(jnp.float32)
    numer = jnp.einsum('bdi,io->bdo', mk * xT, w_irm)
    denom = jnp.einsum('bdi,io->bdo', mk, jnp.abs(w_irm)) + 1e-5
    irm = s_irm[None, None, :] * (numer / denom) + b_irm[None, None, :]
    h = jax.nn.leaky_relu(irm, NEG_SLOPE)                       # (B, D, L)
    y = jnp.transpose(h, (0, 2, 1))                             # (B, L, D)
    y = jax.nn.leaky_relu(y @ ws.T + bs, NEG_SLOPE) + y
    z = jnp.transpose(y, (0, 2, 1))                             # (B, D, L)
    z = jax.nn.leaky_relu(z @ wt.T + bt, NEG_SLOPE) + z
    o = z @ wo.T + bo
    return jnp.transpose(o, (0, 2, 1))                          # (B, L, D)


if __name__ == "__main__":
    key = jax.random.PRNGKey(0)

    # Primary test: module interface (batch, length, dim) at small shapes.
    B, L, D = 2, 8, 4
    kx, km, kp, k2 = jax.random.split(key, 4)
    x = jax.random.normal(kx, (B, L, D), jnp.float32)
    m = (jax.random.uniform(km, (B, L, D)) > 0.3).astype(jnp.float32)  # 0/1 mask
    params = init_params(kp, D, L)

    out = jax.block_until_ready(net_forward(x, m, params))
    ref = net_reference(x, m, params)
    assert out.shape == (B, L, D)
    assert jnp.allclose(out, ref, rtol=5e-2, atol=5e-2), \
        "Pallas output mismatch vs JAX reference (small)"

    # Second test: exercises the multi-step grid / TB > 1 batched row-slab path.
    B2, L2, D2 = 8, 128, 8
    kx2, km2, kp2 = jax.random.split(k2, 3)
    x2 = jax.random.normal(kx2, (B2, L2, D2), jnp.float32)
    m2 = (jax.random.uniform(km2, (B2, L2, D2)) > 0.3).astype(jnp.float32)
    params2 = init_params(kp2, D2, L2)
    out2 = jax.block_until_ready(net_forward(x2, m2, params2))
    ref2 = net_reference(x2, m2, params2)
    assert out2.shape == (B2, L2, D2)
    assert jnp.allclose(out2, ref2, rtol=5e-2, atol=5e-2), \
        "Pallas output mismatch vs JAX reference (batched)"

    print("KERNEL_OK")
</pallas_src>

<mosaic_0001>
module attributes {stable_mosaic.version = 11 : i64} {
  func.func @net_kernel(%arg0: i32, %arg1: memref<8x8xf32, #tpu.memory_space<vmem>>, %arg2: memref<8x8xf32, #tpu.memory_space<vmem>>, %arg3: memref<8x8xbf16, #tpu.memory_space<vmem>>, %arg4: memref<8x8xbf16, #tpu.memory_space<vmem>>, %arg5: memref<1x8xf32, #tpu.memory_space<vmem>>, %arg6: memref<1x8xf32, #tpu.memory_space<vmem>>, %arg7: memref<4x4xbf16, #tpu.memory_space<vmem>>, %arg8: memref<4x1xf32, #tpu.memory_space<vmem>>, %arg9: memref<8x8xbf16, #tpu.memory_space<vmem>>, %arg10: memref<1x8xf32, #tpu.memory_space<vmem>>, %arg11: memref<8x8xbf16, #tpu.memory_space<vmem>>, %arg12: memref<1x8xf32, #tpu.memory_space<vmem>>, %arg13: memref<8x8xf32, #tpu.memory_space<vmem>>) attributes {dimension_semantics = [#tpu.dimension_semantics<parallel>], iteration_bounds = array<i64: 1>, scalar_prefetch = 0 : i64, scratch_operands = 0 : i64, tpu.core_type = #tpu.core_type<tc>, window_params = [{transform_indices = @transform_0, window_bounds = array<i64: 8, 8>}, {transform_indices = @transform_1, window_bounds = array<i64: 8, 8>}, {pipeline_mode = #tpu.pipeline_mode<synchronous>, transform_indices = @transform_2, window_bounds = array<i64: 8, 8>}, {pipeline_mode = #tpu.pipeline_mode<synchronous>, transform_indices = @transform_3, window_bounds = array<i64: 8, 8>}, {pipeline_mode = #tpu.pipeline_mode<synchronous>, transform_indices = @transform_4, window_bounds = array<i64: 1, 8>}, {pipeline_mode = #tpu.pipeline_mode<synchronous>, transform_indices = @transform_5, window_bounds = array<i64: 1, 8>}, {pipeline_mode = #tpu.pipeline_mode<synchronous>, transform_indices = @transform_6, window_bounds = array<i64: 4, 4>}, {pipeline_mode = #tpu.pipeline_mode<synchronous>, transform_indices = @transform_7, window_bounds = array<i64: 4, 1>}, {pipeline_mode = #tpu.pipeline_mode<synchronous>, transform_indices = @transform_8, window_bounds = array<i64: 8, 8>}, {pipeline_mode = #tpu.pipeline_mode<synchronous>, transform_indices = @transform_9, window_bounds = array<i64: 1, 8>}, {pipeline_mode = #tpu.pipeline_mode<synchronous>, transform_indices = @transform_10, window_bounds = array<i64: 8, 8>}, {pipeline_mode = #tpu.pipeline_mode<synchronous>, transform_indices = @transform_11, window_bounds = array<i64: 1, 8>}, {transform_indices = @transform_12, window_bounds = array<i64: 8, 8>}]} {
    %c0 = arith.constant 0 : index
    %c0_0 = arith.constant 0 : index
    %0 = vector.load %arg1[%c0, %c0_0] : memref<8x8xf32, #tpu.memory_space<vmem>>, vector<8x8xf32>
    %c0_1 = arith.constant 0 : index
    %c0_2 = arith.constant 0 : index
    %1 = vector.load %arg2[%c0_1, %c0_2] : memref<8x8xf32, #tpu.memory_space<vmem>>, vector<8x8xf32>
    %cst = arith.constant 0.000000e+00 : f32
    %2 = vector.broadcast %cst : f32 to vector<8x8xf32>
    %3 = arith.cmpf one, %1, %2 : vector<8x8xf32>
    %cst_3 = arith.constant 1.000000e+00 : f32
    %cst_4 = arith.constant 0.000000e+00 : f32
    %4 = vector.broadcast %cst_3 : f32 to vector<8x8xf32>
    %5 = vector.broadcast %cst_4 : f32 to vector<8x8xf32>
    %6 = arith.select %3, %4, %5 : vector<8x8xi1>, vector<8x8xf32>
    %7 = arith.mulf %6, %0 : vector<8x8xf32>
    %8 = arith.truncf %7 : vector<8x8xf32> to vector<8x8xbf16>
    %c0_5 = arith.constant 0 : index
    %c0_6 = arith.constant 0 : index
    %9 = vector.load %arg3[%c0_5, %c0_6] : memref<8x8xbf16, #tpu.memory_space<vmem>>, vector<8x8xbf16>
    %cst_7 = arith.constant dense<0.000000e+00> : vector<8x8xf32>
    %10 = tpu.matmul %8, %9, %cst_7 {dimension_numbers = #tpu.dot_dimension_numbers<[1], [0], [0], [1], [0, 0, 1, 1], [], []>} : vector<8x8xbf16>, vector<8x8xbf16>, vector<8x8xf32> -> vector<8x8xf32>
    %11 = arith.truncf %6 : vector<8x8xf32> to vector<8x8xbf16>
    %c0_8 = arith.constant 0 : index
    %c0_9 = arith.constant 0 : index
    %12 = vector.load %arg4[%c0_8, %c0_9] : memref<8x8xbf16, #tpu.memory_space<vmem>>, vector<8x8xbf16>
    %cst_10 = arith.constant dense<0.000000e+00> : vector<8x8xf32>
    %13 = tpu.matmul %11, %12, %cst_10 {dimension_numbers = #tpu.dot_dimension_numbers<[1], [0], [0], [1], [0, 0, 1, 1], [], []>} : vector<8x8xbf16>, vector<8x8xbf16>, vector<8x8xf32> -> vector<8x8xf32>
    %cst_11 = arith.constant 9.99999974E-6 : f32
    %14 = vector.broadcast %cst_11 : f32 to vector<8x8xf32>
    %15 = arith.addf %13, %14 : vector<8x8xf32>
    %16 = tpu.reciprocal %15 {approx = true} : vector<8x8xf32> -> vector<8x8xf32>
    %c0_12 = arith.constant 0 : index
    %c0_13 = arith.constant 0 : index
    %17 = vector.load %arg5[%c0_12, %c0_13] : memref<1x8xf32, #tpu.memory_space<vmem>>, vector<1x8xf32>
    %18 = arith.mulf %10, %16 : vector<8x8xf32>
    %19 = vector.broadcast %17 : vector<1x8xf32> to vector<8x8xf32>
    %20 = arith.mulf %19, %18 : vector<8x8xf32>
    %c0_14 = arith.constant 0 : index
    %c0_15 = arith.constant 0 : index
    %21 = vector.load %arg6[%c0_14, %c0_15] : memref<1x8xf32, #tpu.memory_space<vmem>>, vector<1x8xf32>
    %22 = vector.broadcast %21 : vector<1x8xf32> to vector<8x8xf32>
    %23 = arith.addf %20, %22 : vector<8x8xf32>
    %cst_16 = arith.constant 0.000000e+00 : f32
    %24 = vector.broadcast %cst_16 : f32 to vector<8x8xf32>
    %25 = arith.cmpf oge, %23, %24 : vector<8x8xf32>
    %cst_17 = arith.constant 0.00999999977 : f32
    %26 = vector.broadcast %cst_17 : f32 to vector<8x8xf32>
    %27 = arith.mulf %26, %23 : vector<8x8xf32>
    %28 = arith.select %25, %23, %27 : vector<8x8xi1>, vector<8x8xf32>
    %c0_18 = arith.constant 0 : index
    %c0_19 = arith.constant 0 : index
    %29 = vector.load %arg7[%c0_18, %c0_19] : memref<4x4xbf16, #tpu.memory_space<vmem>>, vector<4x4xbf16>
    %c0_20 = arith.constant 0 : index
    %c0_21 = arith.constant 0 : index
    %30 = vector.load %arg8[%c0_20, %c0_21] : memref<4x1xf32, #tpu.memory_space<vmem>>, vector<4x1xf32>
    %31 = vector.shape_cast %30 : vector<4x1xf32> to vector<4x1xf32>
    %32 = vector.broadcast %31 : vector<4x1xf32> to vector<4x8xf32>
    %33 = vector.extract_strided_slice %28 {offsets = [0, 0], sizes = [4, 8], strides = [1, 1]} : vector<8x8xf32> to vector<4x8xf32>
    %34 = arith.truncf %33 : vector<4x8xf32> to vector<4x8xbf16>
    %cst_22 = arith.constant dense<0.000000e+00> : vector<4x8xf32>
    %35 = tpu.matmul %29, %34, %cst_22 {dimension_numbers = #tpu.dot_dimension_numbers<[1], [0], [0], [1], [0, 0, 1, 1], [], []>} : vector<4x4xbf16>, vector<4x8xbf16>, vector<4x8xf32> -> vector<4x8xf32>
    %36 = arith.addf %35, %32 : vector<4x8xf32>
    %cst_23 = arith.constant 0.000000e+00 : f32
    %37 = vector.broadcast %cst_23 : f32 to vector<4x8xf32>
    %38 = arith.cmpf oge, %36, %37 : vector<4x8xf32>
    %cst_24 = arith.constant 0.00999999977 : f32
    %39 = vector.broadcast %cst_24 : f32 to vector<4x8xf32>
    %40 = arith.mulf %39, %36 : vector<4x8xf32>
    %41 = arith.select %38, %36, %40 : vector<4x8xi1>, vector<4x8xf32>
    %42 = arith.addf %41, %33 : vector<4x8xf32>
    %c0_25 = arith.constant 0 : index
    %c0_26 = arith.constant 0 : index
    %43 = vector.load %arg13[%c0_25, %c0_26] : memref<8x8xf32, #tpu.memory_space<vmem>>, vector<4x8xf32>
    tpu.vector_store %arg13[%c0_25, %c0_26], %42 {strides = array<i32>} : memref<8x8xf32, #tpu.memory_space<vmem>>, vector<4x8xf32>,
    %44 = vector.extract_strided_slice %28 {offsets = [4, 0], sizes = [4, 8], strides = [1, 1]} : vector<8x8xf32> to vector<4x8xf32>
    %45 = arith.truncf %44 : vector<4x8xf32> to vector<4x8xbf16>
    %cst_27 = arith.constant dense<0.000000e+00> : vector<4x8xf32>
    %46 = tpu.matmul %29, %45, %cst_27 {dimension_numbers = #tpu.dot_dimension_numbers<[1], [0], [0], [1], [0, 0, 1, 1], [], []>} : vector<4x4xbf16>, vector<4x8xbf16>, vector<4x8xf32> -> vector<4x8xf32>
    %47 = arith.addf %46, %32 : vector<4x8xf32>
    %cst_28 = arith.constant 0.000000e+00 : f32
    %48 = vector.broadcast %cst_28 : f32 to vector<4x8xf32>
    %49 = arith.cmpf oge, %47, %48 : vector<4x8xf32>
    %cst_29 = arith.constant 0.00999999977 : f32
    %50 = vector.broadcast %cst_29 : f32 to vector<4x8xf32>
    %51 = arith.mulf %50, %47 : vector<4x8xf32>
    %52 = arith.select %49, %47, %51 : vector<4x8xi1>, vector<4x8xf32>
    %53 = arith.addf %52, %44 : vector<4x8xf32>
    %c4 = arith.constant 4 : index
    %c0_30 = arith.constant 0 : index
    %54 = vector.load %arg13[%c4, %c0_30] : memref<8x8xf32, #tpu.memory_space<vmem>>, vector<4x8xf32>
    tpu.vector_store %arg13[%c4, %c0_30], %53 {strides = array<i32>} : memref<8x8xf32, #tpu.memory_space<vmem>>, vector<4x8xf32>,
    %c0_31 = arith.constant 0 : index
    %c0_32 = arith.constant 0 : index
    %55 = vector.load %arg13[%c0_31, %c0_32] : memref<8x8xf32, #tpu.memory_space<vmem>>, vector<8x8xf32>
    %56 = arith.truncf %55 : vector<8x8xf32> to vector<8x8xbf16>
    %c0_33 = arith.constant 0 : index
    %c0_34 = arith.constant 0 : index
    %57 = vector.load %arg9[%c0_33, %c0_34] : memref<8x8xbf16, #tpu.memory_space<vmem>>, vector<8x8xbf16>
    %cst_35 = arith.constant dense<0.000000e+00> : vector<8x8xf32>
    %58 = tpu.matmul %56, %57, %cst_35 {dimension_numbers = #tpu.dot_dimension_numbers<[1], [0], [0], [1], [0, 0, 1, 1], [], []>} : vector<8x8xbf16>, vector<8x8xbf16>, vector<8x8xf32> -> vector<8x8xf32>
    %c0_36 = arith.constant 0 : index
    %c0_37 = arith.constant 0 : index
    %59 = vector.load %arg10[%c0_36, %c0_37] : memref<1x8xf32, #tpu.memory_space<vmem>>, vector<1x8xf32>
    %60 = vector.broadcast %59 : vector<1x8xf32> to vector<8x8xf32>
    %61 = arith.addf %58, %60 : vector<8x8xf32>
    %cst_38 = arith.constant 0.000000e+00 : f32
    %62 = vector.broadcast %cst_38 : f32 to vector<8x8xf32>
    %63 = arith.cmpf oge, %61, %62 : vector<8x8xf32>
    %cst_39 = arith.constant 0.00999999977 : f32
    %64 = vector.broadcast %cst_39 : f32 to vector<8x8xf32>
    %65 = arith.mulf %64, %61 : vector<8x8xf32>
    %66 = arith.select %63, %61, %65 : vector<8x8xi1>, vector<8x8xf32>
    %67 = arith.addf %66, %55 : vector<8x8xf32>
    %68 = arith.truncf %67 : vector<8x8xf32> to vector<8x8xbf16>
    %c0_40 = arith.constant 0 : index
    %c0_41 = arith.constant 0 : index
    %69 = vector.load %arg11[%c0_40, %c0_41] : memref<8x8xbf16, #tpu.memory_space<vmem>>, vector<8x8xbf16>
    %cst_42 = arith.constant dense<0.000000e+00> : vector<8x8xf32>
    %70 = tpu.matmul %68, %69, %cst_42 {dimension_numbers = #tpu.dot_dimension_numbers<[1], [0], [0], [1], [0, 0, 1, 1], [], []>} : vector<8x8xbf16>, vector<8x8xbf16>, vector<8x8xf32> -> vector<8x8xf32>
    %c0_43 = arith.constant 0 : index
    %c0_44 = arith.constant 0 : index
    %71 = vector.load %arg12[%c0_43, %c0_44] : memref<1x8xf32, #tpu.memory_space<vmem>>, vector<1x8xf32>
    %72 = vector.broadcast %71 : vector<1x8xf32> to vector<8x8xf32>
    %73 = arith.addf %70, %72 : vector<8x8xf32>
    %c0_45 = arith.constant 0 : index
    %c0_46 = arith.constant 0 : index
    %74 = vector.load %arg13[%c0_45, %c0_46] : memref<8x8xf32, #tpu.memory_space<vmem>>, vector<8x8xf32>
    tpu.vector_store %arg13[%c0_45, %c0_46], %73 {strides = array<i32>} : memref<8x8xf32, #tpu.memory_space<vmem>>, vector<8x8xf32>,
    return
  }
  func.func @transform_0(%arg0: i32) -> (i32, i32) {
    %c0_i32 = arith.constant 0 : i32
    %c0_i32_0 = arith.constant 0 : i32
    return %arg0, %c0_i32 : i32, i32
  }
  func.func @transform_1(%arg0: i32) -> (i32, i32) {
    %c0_i32 = arith.constant 0 : i32
    %c0_i32_0 = arith.constant 0 : i32
    return %arg0, %c0_i32 : i32, i32
  }
  func.func @transform_2(%arg0: i32) -> (i32, i32) {
    %c0_i32 = arith.constant 0 : i32
    %c0_i32_0 = arith.constant 0 : i32
    %c0_i32_1 = arith.constant 0 : i32
    return %c0_i32, %c0_i32_0 : i32, i32
  }
  func.func @transform_3(%arg0: i32) -> (i32, i32) {
    %c0_i32 = arith.constant 0 : i32
    %c0_i32_0 = arith.constant 0 : i32
    %c0_i32_1 = arith.constant 0 : i32
    return %c0_i32, %c0_i32_0 : i32, i32
  }
  func.func @transform_4(%arg0: i32) -> (i32, i32) {
    %c0_i32 = arith.constant 0 : i32
    %c0_i32_0 = arith.constant 0 : i32
    %c0_i32_1 = arith.constant 0 : i32
    return %c0_i32, %c0_i32_0 : i32, i32
  }
  func.func @transform_5(%arg0: i32) -> (i32, i32) {
    %c0_i32 = arith.constant 0 : i32
    %c0_i32_0 = arith.constant 0 : i32
    %c0_i32_1 = arith.constant 0 : i32
    return %c0_i32, %c0_i32_0 : i32, i32
  }
  func.func @transform_6(%arg0: i32) -> (i32, i32) {
    %c0_i32 = arith.constant 0 : i32
    %c0_i32_0 = arith.constant 0 : i32
    %c0_i32_1 = arith.constant 0 : i32
    return %c0_i32, %c0_i32_0 : i32, i32
  }
  func.func @transform_7(%arg0: i32) -> (i32, i32) {
    %c0_i32 = arith.constant 0 : i32
    %c0_i32_0 = arith.constant 0 : i32
    %c0_i32_1 = arith.constant 0 : i32
    return %c0_i32, %c0_i32_0 : i32, i32
  }
  func.func @transform_8(%arg0: i32) -> (i32, i32) {
    %c0_i32 = arith.constant 0 : i32
    %c0_i32_0 = arith.constant 0 : i32
    %c0_i32_1 = arith.constant 0 : i32
    return %c0_i32, %c0_i32_0 : i32, i32
  }
  func.func @transform_9(%arg0: i32) -> (i32, i32) {
    %c0_i32 = arith.constant 0 : i32
    %c0_i32_0 = arith.constant 0 : i32
    %c0_i32_1 = arith.constant 0 : i32
    return %c0_i32, %c0_i32_0 : i32, i32
  }
  func.func @transform_10(%arg0: i32) -> (i32, i32) {
    %c0_i32 = arith.constant 0 : i32
    %c0_i32_0 = arith.constant 0 : i32
    %c0_i32_1 = arith.constant 0 : i32
    return %c0_i32, %c0_i32_0 : i32, i32
  }
  func.func @transform_11(%arg0: i32) -> (i32, i32) {
    %c0_i32 = arith.constant 0 : i32
    %c0_i32_0 = arith.constant 0 : i32
    %c0_i32_1 = arith.constant 0 : i32
    return %c0_i32, %c0_i32_0 : i32, i32
  }
  func.func @transform_12(%arg0: i32) -> (i32, i32) {
    %c0_i32 = arith.constant 0 : i32
    %c0_i32_0 = arith.constant 0 : i32
    return %arg0, %c0_i32 : i32, i32
  }
}

</mosaic_0001>

<llo_original>
// kernel: tpu_custom_call.1
$region0: #{tpu_custom_call.1}
  #allocation0 [shape = 'u32[]', space=smem, size = 0x4, offset = 0x4, fixed_abs, tag = 'smem constant byte address 0x4 - core index']
  #allocation1 [shape = 'u32[144,128]{1,0:T(1,128)}', space=vmem, size = 0x12000, scoped, tag = 'internal scratch']
  %s0 = inlined_call_operand.hbm [shape: f32[8,8], index: 0, kind: input, shape index: {}]
  %s1 = inlined_call_operand.vmem [shape: f32[8,8], index: 1, kind: input, shape index: {}]
  %s2 = inlined_call_operand.vmem [shape: bf16[8,8], index: 2, kind: input, shape index: {}]
  %s3 = inlined_call_operand.vmem [shape: bf16[8,8], index: 3, kind: input, shape index: {}]
  %s4 = inlined_call_operand.hbm [shape: f32[1,8], index: 4, kind: input, shape index: {}]
  %s5 = inlined_call_operand.hbm [shape: f32[1,8], index: 5, kind: input, shape index: {}]
  %s6 = inlined_call_operand.vmem [shape: bf16[4,4], index: 6, kind: input, shape index: {}]
  %s7 = inlined_call_operand.vmem [shape: f32[4,1], index: 7, kind: input, shape index: {}]
  %s8 = inlined_call_operand.vmem [shape: bf16[8,8], index: 8, kind: input, shape index: {}]
  %s9 = inlined_call_operand.vmem [shape: f32[1,8], index: 9, kind: input, shape index: {}]
  %s10 = inlined_call_operand.vmem [shape: bf16[8,8], index: 10, kind: input, shape index: {}]
  %s11 = inlined_call_operand.vmem [shape: f32[1,8], index: 11, kind: input, shape index: {}]
  %s12 = inlined_call_operand.hbm [shape: f32[8,8], index: 12, kind: output, shape index: {}]
  %s13 = sld [smem:[#allocation0]]
  $region70: #{tpu_custom_call.1} parent=0
    _
  %s15 = ssub.s32 1, %s13
  %s16 = scalar_select 0, %s15, %s13
  $region1: #{tpu_custom_call.1} parent=0
    #allocation2 [shape = 'u8[4096]{0}', space=vmem, size = 0x1000, scoped, tag = 'input window, operand 0, single buffered']
    #allocation3 [shape = 's32[1]{0}', space=sflag, size = 0x4, scoped, tag = 'scoped memory for tpu_custom_call.1']
    #allocation4 [shape = 's32[1]{0}', space=sflag, size = 0x4, scoped, tag = 'scoped memory for tpu_custom_call.1']
    #allocation5 [shape = 'u8[512]{0}', space=vmem, size = 0x400, scoped, tag = 'input window, operand 4, single buffered']
    #allocation6 [shape = 's32[1]{0}', space=sflag, size = 0x4, scoped, tag = 'scoped memory for tpu_custom_call.1']
    #allocation7 [shape = 'u8[512]{0}', space=vmem, size = 0x400, scoped, tag = 'input window, operand 5, single buffered']
    #allocation8 [shape = 'u8[4096]{0}', space=vmem, size = 0x1000, scoped, tag = 'output window, operand 0, single buffered']
    %17 = vsyncpa [#allocation3], 0
    %18 = vsyncpa [#allocation6], 0
    %19 = vsyncpa [#allocation4], 0
    // Predicated region
    $region2: #{tpu_custom_call.1} parent=1 // pred_check
      _
    $region3: #{tpu_custom_call.1} parent=1 // pred_check_branch
      %21 = sbr.rel (0) target = $region5
    $region4: #{tpu_custom_call.1} parent=1 // pred_region
      %s23 = ssub.s32 128, 128
      %24 = vsyncadd [#allocation3], %s23
      %s26 = sshll.u32 [#allocation2], 4
      %s27 = int_to_ptr.vmem [resolvable:$true] %s26
      %29 = dma.hbm_to_vmem [thread:$0]  %s0, 128, %s27, [#allocation3]
    $region5: #{tpu_custom_call.1} parent=1 // pred_fallthru
      _
    // Predicated region
    $region6: #{tpu_custom_call.1} parent=1 // pred_check
      _
    $region7: #{tpu_custom_call.1} parent=1 // pred_check_branch
      %31 = sbr.rel (0) target = $region9
    $region8: #{tpu_custom_call.1} parent=1 // pred_region
      _
    $region9: #{tpu_custom_call.1} parent=1 // pred_fallthru
      _
    // Predicated region
    $region10: #{tpu_custom_call.1} parent=1 // pred_check
      _
    $region11: #{tpu_custom_call.1} parent=1 // pred_check_branch
      %33 = sbr.rel (0) target = $region13
    $region12: #{tpu_custom_call.1} parent=1 // pred_region
      _
    $region13: #{tpu_custom_call.1} parent=1 // pred_fallthru
      _
    // Predicated region
    $region14: #{tpu_custom_call.1} parent=1 // pred_check
      _
    $region15: #{tpu_custom_call.1} parent=1 // pred_check_branch
      %35 = sbr.rel (0) target = $region17
    $region16: #{tpu_custom_call.1} parent=1 // pred_region
      _
    $region17: #{tpu_custom_call.1} parent=1 // pred_fallthru
      _
    // Predicated region
    $region18: #{tpu_custom_call.1} parent=1 // pred_check
      _
    $region19: #{tpu_custom_call.1} parent=1 // pred_check_branch
      %37 = sbr.rel (0) target = $region21
    $region20: #{tpu_custom_call.1} parent=1 // pred_region
      %s39 = ssub.s32 16, 16
      %40 = vsyncadd [#allocation6], %s39
      %s42 = sshll.u32 [#allocation5], 4
      %s43 = int_to_ptr.vmem [resolvable:$true] %s42
      %45 = dma.hbm_to_vmem [thread:$0]  %s4, 16, %s43, [#allocation6]
    $region21: #{tpu_custom_call.1} parent=1 // pred_fallthru
      _
    // Predicated region
    $region22: #{tpu_custom_call.1} parent=1 // pred_check
      _
    $region23: #{tpu_custom_call.1} parent=1 // pred_check_branch
      %47 = sbr.rel (0) target = $region25
    $region24: #{tpu_custom_call.1} parent=1 // pred_region
      %s49 = ssub.s32 16, 16
      %50 = vsyncadd [#allocation6], %s49
      %s52 = sshll.u32 [#allocation7], 4
      %s53 = int_to_ptr.vmem [resolvable:$true] %s52
      %55 = dma.hbm_to_vmem [thread:$0]  %s5, 16, %s53, [#allocation6]
    $region25: #{tpu_custom_call.1} parent=1 // pred_fallthru
      _
    // Predicated region
    $region26: #{tpu_custom_call.1} parent=1 // pred_check
      _
    $region27: #{tpu_custom_call.1} parent=1 // pred_check_branch
      %57 = sbr.rel (0) target = $region29
    $region28: #{tpu_custom_call.1} parent=1 // pred_region
      _
    $region29: #{tpu_custom_call.1} parent=1 // pred_fallthru
      _
    // Predicated region
    $region30: #{tpu_custom_call.1} parent=1 // pred_check
      _
    $region31: #{tpu_custom_call.1} parent=1 // pred_check_branch
      %59 = sbr.rel (0) target = $region33
    $region32: #{tpu_custom_call.1} parent=1 // pred_region
      _
    $region33: #{tpu_custom_call.1} parent=1 // pred_fallthru
      _
    // Predicated region
    $region34: #{tpu_custom_call.1} parent=1 // pred_check
      _
    $region35: #{tpu_custom_call.1} parent=1 // pred_check_branch
      %61 = sbr.rel (0) target = $region37
    $region36: #{tpu_custom_call.1} parent=1 // pred_region
      _
    $region37: #{tpu_custom_call.1} parent=1 // pred_fallthru
      _
    // Predicated region
    $region38: #{tpu_custom_call.1} parent=1 // pred_check
      _
    $region39: #{tpu_custom_call.1} parent=1 // pred_check_branch
      %63 = sbr.rel (0) target = $region41
    $region40: #{tpu_custom_call.1} parent=1 // pred_region
      _
    $region41: #{tpu_custom_call.1} parent=1 // pred_fallthru
      _
    // Predicated region
    $region42: #{tpu_custom_call.1} parent=1 // pred_check
      _
    $region43: #{tpu_custom_call.1} parent=1 // pred_check_branch
      %65 = sbr.rel (0) target = $region45
    $region44: #{tpu_custom_call.1} parent=1 // pred_region
      _
    $region45: #{tpu_custom_call.1} parent=1 // pred_fallthru
      _
    // Predicated region
    $region46: #{tpu_custom_call.1} parent=1 // pred_check
      _
    $region47: #{tpu_custom_call.1} parent=1 // pred_check_branch
      %67 = sbr.rel (0) target = $region49
    $region48: #{tpu_custom_call.1} parent=1 // pred_region
      _
    $region49: #{tpu_custom_call.1} parent=1 // pred_fallthru
      _
    // Predicated region
    $region50: #{tpu_custom_call.1} parent=1 // pred_check
      _
    $region51: #{tpu_custom_call.1} parent=1 // pred_check_branch
      %69 = sbr.rel (0) target = $region53
    $region52: #{tpu_custom_call.1} parent=1 // pred_region
      %70 = dma.done [#allocation3], 128
    $region53: #{tpu_custom_call.1} parent=1 // pred_fallthru
      _
    // Predicated region
    $region54: #{tpu_custom_call.1} parent=1 // pred_check
      _
    $region55: #{tpu_custom_call.1} parent=1 // pred_check_branch
      %72 = sbr.rel (0) target = $region57
    $region56: #{tpu_custom_call.1} parent=1 // pred_region
      %73 = dma.done [#allocation6], 16
    $region57: #{tpu_custom_call.1} parent=1 // pred_fallthru
      _
    // Predicated region
    $region58: #{tpu_custom_call.1} parent=1 // pred_check
      _
    $region59: #{tpu_custom_call.1} parent=1 // pred_check_branch
      %75 = sbr.rel (0) target = $region61
    $region60: #{tpu_custom_call.1} parent=1 // pred_region
      %76 = dma.done [#allocation6], 16
    $region61: #{tpu_custom_call.1} parent=1 // pred_fallthru
      _
    %v78 = vld [vmem:[#allocation2] sm:$0xff]
    %v79 = vld [vmem:[%s1] sm:$0xff]
    %vm80 = vcmp.ne.f32.partialorder %v79, 0.0
    %v81 = vsel %vm80, 1.0, 0.0
    %v82 = vmul.f32 %v81, %v78
    %v83 = vpack.c.bf16 %v82, %v82
    %v84 = vld [vmem:[%s2] sm:$0xf]
    %vm85 = vcmask 64512
    %v87 = vsel %vm85, %v83, 0
    %vm89 = vcmask 1043456
    %v91 = vsel %vm89, %v84, 0
    %93 = vmatprep.subr.bf16.mxu0 0
    %94 = vmatpush1.bf16.msra.mxu0 %v91
    %95 = vmatprep.subr.bf16.mxu0 0
    %96 = vmatpush1.bf16.msra.mxu0 0
    %97 = vmatprep.subr.bf16.mxu0 0
    %98 = vmatpush1.bf16.msra.mxu0 0
    %99 = vmatprep.subr.bf16.mxu0 0
    %100 = vmatpush1.bf16.msra.mxu0 0
    %101 = vmatprep.subr.bf16.mxu0 0
    %102 = vmatpush1.bf16.msra.mxu0 0
    %103 = vmatprep.subr.bf16.mxu0 0
    %104 = vmatpush1.bf16.msra.mxu0 0
    %105 = vmatprep.subr.bf16.mxu0 0
    %106 = vmatpush1.bf16.msra.mxu0 0
    %107 = vmatprep.subr.bf16.mxu0 0
    %108 = vmatpush1.bf16.msra.mxu0 0
    %109 = vmatprep.subr.bf16.mxu0 0
    %110 = vmatpush1.bf16.msra.mxu0 0
    %111 = vmatprep.subr.bf16.mxu0 0
    %112 = vmatpush1.bf16.msra.mxu0 0
    %113 = vmatprep.subr.bf16.mxu0 0
    %114 = vmatpush1.bf16.msra.mxu0 0
    %115 = vmatprep.subr.bf16.mxu0 0
    %116 = vmatpush1.bf16.msra.mxu0 0
    %117 = vmatprep.subr.bf16.mxu0 0
    %118 = vmatpush1.bf16.msra.mxu0 0
    %119 = vmatprep.subr.bf16.mxu0 0
    %120 = vmatpush1.bf16.msra.mxu0 0
    %121 = vmatprep.subr.bf16.mxu0 0
    %122 = vmatpush1.bf16.msra.mxu0 0
    %123 = vmatprep.subr.bf16.mxu0 0
    %124 = vmatpush1.bf16.msra.mxu0 0
    %125 = vmatprep.mubr.bf16.mxu0 0
    %126 = vmatmul.mubr.bf16.gmra.mrb[0].mxu0 %v87
    %v127 = vpop.f32.mrb[0].mxu0
    %v128 = vadd.f32 0.0, %v127
    %v129 = vpop.f32.mrb[0].mxu0
    %v130 = vpop.f32.mrb[0].mxu0
    %v131 = vpop.f32.mrb[0].mxu0
    %132 = vdwg.mxu0
    %v133 = vpack.c.bf16 %v81, %v81
    %v134 = vld [vmem:[%s3] sm:$0xf]
    %v136 = vsel %vm85, %v133, 0
    %v139 = vsel %vm89, %v134, 0
    %141 = vmatprep.subr.bf16.mxu0 0
    %142 = vmatpush1.bf16.msra.mxu0 %v139
    %143 = vmatprep.subr.bf16.mxu0 0
    %144 = vmatpush1.bf16.msra.mxu0 0
    %145 = vmatprep.subr.bf16.mxu0 0
    %146 = vmatpush1.bf16.msra.mxu0 0
    %147 = vmatprep.subr.bf16.mxu0 0
    %148 = vmatpush1.bf16.msra.mxu0 0
    %149 = vmatprep.subr.bf16.mxu0 0
    %150 = vmatpush1.bf16.msra.mxu0 0
    %151 = vmatprep.subr.bf16.mxu0 0
    %152 = vmatpush1.bf16.msra.mxu0 0
    %153 = vmatprep.subr.bf16.mxu0 0
    %154 = vmatpush1.bf16.msra.mxu0 0
    %155 = vmatprep.subr.bf16.mxu0 0
    %156 = vmatpush1.bf16.msra.mxu0 0
    %157 = vmatprep.subr.bf16.mxu0 0
    %158 = vmatpush1.bf16.msra.mxu0 0
    %159 = vmatprep.subr.bf16.mxu0 0
    %160 = vmatpush1.bf16.msra.mxu0 0
    %161 = vmatprep.subr.bf16.mxu0 0
    %162 = vmatpush1.bf16.msra.mxu0 0
    %163 = vmatprep.subr.bf16.mxu0 0
    %164 = vmatpush1.bf16.msra.mxu0 0
    %165 = vmatprep.subr.bf16.mxu0 0
    %166 = vmatpush1.bf16.msra.mxu0 0
    %167 = vmatprep.subr.bf16.mxu0 0
    %168 = vmatpush1.bf16.msra.mxu0 0
    %169 = vmatprep.subr.bf16.mxu0 0
    %170 = vmatpush1.bf16.msra.mxu0 0
    %171 = vmatprep.subr.bf16.mxu0 0
    %172 = vmatpush1.bf16.msra.mxu0 0
    %173 = vmatprep.mubr.bf16.mxu0 0
    %174 = vmatmul.mubr.bf16.gmra.mrb[0].mxu0 %v136
    %v175 = vpop.f32.mrb[0].mxu0
    %v176 = vadd.f32 1e-05, %v175
    %v177 = vpop.f32.mrb[0].mxu0
    %v178 = vpop.f32.mrb[0].mxu0
    %v179 = vpop.f32.mrb[0].mxu0
    %180 = vdwg.mxu0
    %v181 = vrcp.pop %v176
    %v182 = vld [vmem:[#allocation5] sm:$0x1]
    %v183 = vmul.f32 %v128, %v181
    %v185 = vlaneseq
    %v186 = vshrl.u32 %v185, 7
    %v187 = vsub.s32 0, %v186
    %v188 = vrot.slane %v182, %v187
    %v190 = vmul.f32 %v188, %v183
    %v191 = vld [vmem:[#allocation7] sm:$0x1]
    %v193 = vlaneseq
    %v194 = vshrl.u32 %v193, 7
    %v195 = vsub.s32 0, %v194
    %v196 = vrot.slane %v191, %v195
    %v198 = vadd.f32 %v190, %v196
    %vm199 = vcmp.ge.f32.partialorder %v198, 0.0
    %v200 = vmul.f32 %v198, 0.01
    %v201 = vsel %vm199, %v198, %v200
    %v202 = vld [vmem:[%s6] sm:$0x3]
    %v203 = vld [vmem:[%s7] sm:$0xf]
    %205 = vset.pattern.permute.xlu0 0
    %206 = vperm.xlu0 %205, %v203
    %v207 = vpop.permute.xlu0 %206
    %v209 = vpack.c.bf16 %v201, %v201
    %vm210 = vcmask 31744
    %v212 = vsel %vm210, %v202, 0
    %vm214 = vcmask 1041408
    %v216 = vsel %vm214, %v209, 0
    %218 = vmatprep.subr.bf16.mxu0 0
    %219 = vmatpush1.bf16.msra.mxu0 %v216
    %220 = vmatprep.subr.bf16.mxu0 0
    %221 = vmatpush1.bf16.msra.mxu0 0
    %222 = vmatprep.subr.bf16.mxu0 0
    %223 = vmatpush1.bf16.msra.mxu0 0
    %224 = vmatprep.subr.bf16.mxu0 0
    %225 = vmatpush1.bf16.msra.mxu0 0
    %226 = vmatprep.subr.bf16.mxu0 0
    %227 = vmatpush1.bf16.msra.mxu0 0
    %228 = vmatprep.subr.bf16.mxu0 0
    %229 = vmatpush1.bf16.msra.mxu0 0
    %230 = vmatprep.subr.bf16.mxu0 0
    %231 = vmatpush1.bf16.msra.mxu0 0
    %232 = vmatprep.subr.bf16.mxu0 0
    %233 = vmatpush1.bf16.msra.mxu0 0
    %234 = vmatprep.subr.bf16.mxu0 0
    %235 = vmatpush1.bf16.msra.mxu0 0
    %236 = vmatprep.subr.bf16.mxu0 0
    %237 = vmatpush1.bf16.msra.mxu0 0
    %238 = vmatprep.subr.bf16.mxu0 0
    %239 = vmatpush1.bf16.msra.mxu0 0
    %240 = vmatprep.subr.bf16.mxu0 0
    %241 = vmatpush1.bf16.msra.mxu0 0
    %242 = vmatprep.subr.bf16.mxu0 0
    %243 = vmatpush1.bf16.msra.mxu0 0
    %244 = vmatprep.subr.bf16.mxu0 0
    %245 = vmatpush1.bf16.msra.mxu0 0
    %246 = vmatprep.subr.bf16.mxu0 0
    %247 = vmatpush1.bf16.msra.mxu0 0
    %248 = vmatprep.subr.bf16.mxu0 0
    %249 = vmatpush1.bf16.msra.mxu0 0
    %250 = vmatprep.mubr.bf16.mxu0 0
    %251 = vmatmul.mubr.bf16.gmra.mrb[0].mxu0 %v212
    %v252 = vpop.f32.mrb[0].mxu0
    %v253 = vadd.f32 %v207, %v252
    %v254 = vpop.f32.mrb[0].mxu0
    %v255 = vpop.f32.mrb[0].mxu0
    %v256 = vpop.f32.mrb[0].mxu0
    %257 = vdwg.mxu0
    %vm258 = vcmp.ge.f32.partialorder %v253, 0.0
    %v259 = vmul.f32 %v253, 0.01
    %v260 = vsel %vm258, %v253, %v259
    %v261 = vadd.f32 %v260, %v201
    %vm262 = vcmask 60416
    %263 = vst.msk [vmem:[#allocation8] sm:$0xf] %vm262, %v261
    %v265 = vrot.slane %v209, 2
    %v267 = vsel %vm214, %v265, 0
    %269 = vmatprep.subr.bf16.mxu0 0
    %270 = vmatpush1.bf16.msra.mxu0 %v267
    %271 = vmatprep.subr.bf16.mxu0 0
    %272 = vmatpush1.bf16.msra.mxu0 0
    %273 = vmatprep.subr.bf16.mxu0 0
    %274 = vmatpush1.bf16.msra.mxu0 0
    %275 = vmatprep.subr.bf16.mxu0 0
    %276 = vmatpush1.bf16.msra.mxu0 0
    %277 = vmatprep.subr.bf16.mxu0 0
    %278 = vmatpush1.bf16.msra.mxu0 0
    %279 = vmatprep.subr.bf16.mxu0 0
    %280 = vmatpush1.bf16.msra.mxu0 0
    %281 = vmatprep.subr.bf16.mxu0 0
    %282 = vmatpush1.bf16.msra.mxu0 0
    %283 = vmatprep.subr.bf16.mxu0 0
    %284 = vmatpush1.bf16.msra.mxu0 0
    %285 = vmatprep.subr.bf16.mxu0 0
    %286 = vmatpush1.bf16.msra.mxu0 0
    %287 = vmatprep.subr.bf16.mxu0 0
    %288 = vmatpush1.bf16.msra.mxu0 0
    %289 = vmatprep.subr.bf16.mxu0 0
    %290 = vmatpush1.bf16.msra.mxu0 0
    %291 = vmatprep.subr.bf16.mxu0 0
    %292 = vmatpush1.bf16.msra.mxu0 0
    %293 = vmatprep.subr.bf16.mxu0 0
    %294 = vmatpush1.bf16.msra.mxu0 0
    %295 = vmatprep.subr.bf16.mxu0 0
    %296 = vmatpush1.bf16.msra.mxu0 0
    %297 = vmatprep.subr.bf16.mxu0 0
    %298 = vmatpush1.bf16.msra.mxu0 0
    %299 = vmatprep.subr.bf16.mxu0 0
    %300 = vmatpush1.bf16.msra.mxu0 0
    %301 = vmatprep.mubr.bf16.mxu0 0
    %302 = vmatmul.mubr.bf16.gmra.mrb[0].mxu0 %v212
    %v303 = vpop.f32.mrb[0].mxu0
    %v304 = vadd.f32 %v207, %v303
    %v305 = vpop.f32.mrb[0].mxu0
    %v306 = vpop.f32.mrb[0].mxu0
    %v307 = vpop.f32.mrb[0].mxu0
    %308 = vdwg.mxu0
    %vm309 = vcmp.ge.f32.partialorder %v304, 0.0
    %v310 = vmul.f32 %v304, 0.01
    %v311 = vsel %vm309, %v304, %v310
    %v313 = vrot.slane %v201, 4
    %v315 = vadd.f32 %v311, %v313
    %316 = vst.msk [vmem:[#allocation8 + $0x4] sm:$0xf] %vm262, %v315
    %v317 = vld [vmem:[#allocation8] sm:$0xff]
    %v318 = vpack.c.bf16 %v317, %v317
    %v319 = vld [vmem:[%s8] sm:$0xf]
    %v320 = vld [vmem:[%s9] sm:$0x1]
    %v322 = vlaneseq
    %v323 = vshrl.u32 %v322, 7
    %v324 = vsub.s32 0, %v323
    %v325 = vrot.slane %v320, %v324
    %v328 = vsel %vm85, %v318, 0
    %v331 = vsel %vm89, %v319, 0
    %333 = vmatprep.subr.bf16.mxu0 0
    %334 = vmatpush1.bf16.msra.mxu0 %v331
    %335 = vmatprep.subr.bf16.mxu0 0
    %336 = vmatpush1.bf16.msra.mxu0 0
    %337 = vmatprep.subr.bf16.mxu0 0
    %338 = vmatpush1.bf16.msra.mxu0 0
    %339 = vmatprep.subr.bf16.mxu0 0
    %340 = vmatpush1.bf16.msra.mxu0 0
    %341 = vmatprep.subr.bf16.mxu0 0
    %342 = vmatpush1.bf16.msra.mxu0 0
    %343 = vmatprep.subr.bf16.mxu0 0
    %344 = vmatpush1.bf16.msra.mxu0 0
    %345 = vmatprep.subr.bf16.mxu0 0
    %346 = vmatpush1.bf16.msra.mxu0 0
    %347 = vmatprep.subr.bf16.mxu0 0
    %348 = vmatpush1.bf16.msra.mxu0 0
    %349 = vmatprep.subr.bf16.mxu0 0
    %350 = vmatpush1.bf16.msra.mxu0 0
    %351 = vmatprep.subr.bf16.mxu0 0
    %352 = vmatpush1.bf16.msra.mxu0 0
    %353 = vmatprep.subr.bf16.mxu0 0
    %354 = vmatpush1.bf16.msra.mxu0 0
    %355 = vmatprep.subr.bf16.mxu0 0
    %356 = vmatpush1.bf16.msra.mxu0 0
    %357 = vmatprep.subr.bf16.mxu0 0
    %358 = vmatpush1.bf16.msra.mxu0 0
    %359 = vmatprep.subr.bf16.mxu0 0
    %360 = vmatpush1.bf16.msra.mxu0 0
    %361 = vmatprep.subr.bf16.mxu0 0
    %362 = vmatpush1.bf16.msra.mxu0 0
    %363 = vmatprep.subr.bf16.mxu0 0
    %364 = vmatpush1.bf16.msra.mxu0 0
    %365 = vmatprep.mubr.bf16.mxu0 0
    %366 = vmatmul.mubr.bf16.gmra.mrb[0].mxu0 %v328
    %v367 = vpop.f32.mrb[0].mxu0
    %v368 = vadd.f32 %v325, %v367
    %v369 = vpop.f32.mrb[0].mxu0
    %v370 = vpop.f32.mrb[0].mxu0
    %v371 = vpop.f32.mrb[0].mxu0
    %372 = vdwg.mxu0
    %vm373 = vcmp.ge.f32.partialorder %v368, 0.0
    %v374 = vmul.f32 %v368, 0.01
    %v375 = vsel %vm373, %v368, %v374
    %v376 = vadd.f32 %v375, %v317
    %v377 = vpack.c.bf16 %v376, %v376
    %v378 = vld [vmem:[%s10] sm:$0xf]
    %v379 = vld [vmem:[%s11] sm:$0x1]
    %v381 = vlaneseq
    %v382 = vshrl.u32 %v381, 7
    %v383 = vsub.s32 0, %v382
    %v384 = vrot.slane %v379, %v383
    %v387 = vsel %vm85, %v377, 0
    %v390 = vsel %vm89, %v378, 0
    %392 = vmatprep.subr.bf16.mxu0 0
    %393 = vmatpush1.bf16.msra.mxu0 %v390
    %394 = vmatprep.subr.bf16.mxu0 0
    %395 = vmatpush1.bf16.msra.mxu0 0
    %396 = vmatprep.subr.bf16.mxu0 0
    %397 = vmatpush1.bf16.msra.mxu0 0
    %398 = vmatprep.subr.bf16.mxu0 0
    %399 = vmatpush1.bf16.msra.mxu0 0
    %400 = vmatprep.subr.bf16.mxu0 0
    %401 = vmatpush1.bf16.msra.mxu0 0
    %402 = vmatprep.subr.bf16.mxu0 0
    %403 = vmatpush1.bf16.msra.mxu0 0
    %404 = vmatprep.subr.bf16.mxu0 0
    %405 = vmatpush1.bf16.msra.mxu0 0
    %406 = vmatprep.subr.bf16.mxu0 0
    %407 = vmatpush1.bf16.msra.mxu0 0
    %408 = vmatprep.subr.bf16.mxu0 0
    %409 = vmatpush1.bf16.msra.mxu0 0
    %410 = vmatprep.subr.bf16.mxu0 0
    %411 = vmatpush1.bf16.msra.mxu0 0
    %412 = vmatprep.subr.bf16.mxu0 0
    %413 = vmatpush1.bf16.msra.mxu0 0
    %414 = vmatprep.subr.bf16.mxu0 0
    %415 = vmatpush1.bf16.msra.mxu0 0
    %416 = vmatprep.subr.bf16.mxu0 0
    %417 = vmatpush1.bf16.msra.mxu0 0
    %418 = vmatprep.subr.bf16.mxu0 0
    %419 = vmatpush1.bf16.msra.mxu0 0
    %420 = vmatprep.subr.bf16.mxu0 0
    %421 = vmatpush1.bf16.msra.mxu0 0
    %422 = vmatprep.subr.bf16.mxu0 0
    %423 = vmatpush1.bf16.msra.mxu0 0
    %424 = vmatprep.mubr.bf16.mxu0 0
    %425 = vmatmul.mubr.bf16.gmra.mrb[0].mxu0 %v387
    %v426 = vpop.f32.mrb[0].mxu0
    %v427 = vadd.f32 %v384, %v426
    %v428 = vpop.f32.mrb[0].mxu0
    %v429 = vpop.f32.mrb[0].mxu0
    %v430 = vpop.f32.mrb[0].mxu0
    %431 = vdwg.mxu0
    %432 = vst.msk [vmem:[#allocation8] sm:$0xff] %vm85, %v427
    // Predicated region
    $region62: #{tpu_custom_call.1} parent=1 // pred_check
      _
    $region63: #{tpu_custom_call.1} parent=1 // pred_check_branch
      %434 = sbr.rel (0) target = $region65
    $region64: #{tpu_custom_call.1} parent=1 // pred_region
      %s436 = ssub.s32 128, 128
      %437 = vsyncadd [#allocation4], %s436
      %s439 = sshll.u32 [#allocation8], 4
      %s440 = int_to_ptr.vmem [resolvable:$true] %s439
      %442 = dma.vmem_to_hbm [thread:$0]  %s440, 128, %s12, [#allocation4]
    $region65: #{tpu_custom_call.1} parent=1 // pred_fallthru
      _
    // Predicated region
    $region66: #{tpu_custom_call.1} parent=1 // pred_check
      _
    $region67: #{tpu_custom_call.1} parent=1 // pred_check_branch
      %444 = sbr.rel (0) target = $region69
    $region68: #{tpu_custom_call.1} parent=1 // pred_region
      %445 = dma.done [#allocation4], 128
    $region69: #{tpu_custom_call.1} parent=1 // pred_fallthru
      _
    %446 = vsyncpa [#allocation3], 1
    %447 = vsyncpa [#allocation6], 1
    %448 = vsyncpa [#allocation4], 1

</llo_original>
